<compile_context>
chip_gen: v6e
topology: v6e:2x2x1
jax: 0.10.0
libtpu: 0.0.40
codegen_flags: <defaults>
</compile_context>

<pallas_src>
import functools

import jax
import jax.numpy as jnp
from jax import lax
from jax.experimental import pallas as pl
from jax.experimental.pallas import tpu as pltpu

_NEG = -1.0e30  # very-negative sentinel (finite, so no inf-inf NaNs)


def _round_up(x, m):
    return ((x + m - 1) // m) * m


# ----------------------------------------------------------------------------
# Pass 1: per-topic softmax stats of wt = T @ W (online max / lane-partial
#         sum-exp) and the running top-k candidates of wt (per vocab half).
# ----------------------------------------------------------------------------
def _stats_kernel(t_ref, w_ref, m_ref, z_ref, cand_ref,
                  *, topk, tile_v, v_real, k_pad, n_half):
    c = pl.program_id(0)   # vocab half (parallel across TensorCores on v7x)
    vi = pl.program_id(1)  # vocab tile within the half (reduction axis)

    @pl.when(vi == 0)
    def _init():
        m_ref[...] = jnp.full((k_pad, 128), _NEG, jnp.float32)
        z_ref[...] = jnp.zeros((k_pad, 128), jnp.float32)
        cand_ref[...] = jnp.full((k_pad, 128), _NEG, jnp.float32)

    # wt tile on the MXU (bf16 operands, f32 accumulation).
    wt = jnp.dot(t_ref[...], w_ref[...], preferred_element_type=jnp.float32)  # [Kp,tV]
    col = (c * n_half + vi) * tile_v + lax.broadcasted_iota(
        jnp.int32, (k_pad, tile_v), 1)
    wt = jnp.where(col < v_real, wt, _NEG)  # mask padded vocab columns

    # Online (flash-style) row max; z kept as per-lane partial sums so no
    # per-step cross-lane reduce is needed (the tiny JAX combine finishes it).
    m_old = m_ref[...]                                          # [Kp,128] replicated
    tile_max = jnp.max(wt, axis=1, keepdims=True)               # [Kp,1]
    m_new = jnp.maximum(m_old, tile_max)                        # [Kp,128]
    e = jnp.exp(wt - m_new[:, 0:1])                             # [Kp,tV]
    z = z_ref[...] * jnp.exp(m_old - m_new)
    for q in range(tile_v // 128):                              # VPU adds only
        z = z + e[:, q * 128:(q + 1) * 128]
    z_ref[...] = z
    m_ref[...] = m_new

    # Running per-row top-k candidates of wt (distinct maxima; ties collapse).
    # Cost is linear in topk (VPU/XLU hot spot of this pass for large topk).
    lane = lax.broadcasted_iota(jnp.int32, (k_pad, 128), 1)

    def body(j, carry):
        cand, tile, newc = carry
        cur = jnp.maximum(jnp.max(cand, axis=1, keepdims=True),
                          jnp.max(tile, axis=1, keepdims=True))  # [Kp,1]
        newc = jnp.where(lane == j, cur, newc)
        cand = jnp.where(cand >= cur, _NEG, cand)
        tile = jnp.where(tile >= cur, _NEG, tile)
        return cand, tile, newc

    init = (cand_ref[...], wt, jnp.full((k_pad, 128), _NEG, jnp.float32))
    _, _, new_cand = lax.fori_loop(0, topk, body, init, unroll=(topk <= 8))
    cand_ref[...] = new_cand


# ----------------------------------------------------------------------------
# Pass 2: STDR accumulators (Gram G = f f^T, lane-partial row sums F of the
#         top-k filtered numerators) + emit normalized beta tiles in bf16.
# ----------------------------------------------------------------------------
def _stdr_kernel(t_ref, w_ref, m_ref, thr_ref, invz_ref,
                 beta_ref, g_ref, fsum_ref,
                 *, tile_v, v_real, k_pad, n_half):
    c = pl.program_id(0)
    vi = pl.program_id(1)

    @pl.when(vi == 0)
    def _init():
        g_ref[...] = jnp.zeros_like(g_ref)
        fsum_ref[...] = jnp.zeros_like(fsum_ref)

    wt = jnp.dot(t_ref[...], w_ref[...], preferred_element_type=jnp.float32)  # [Kp,tV]
    col = (c * n_half + vi) * tile_v + lax.broadcasted_iota(
        jnp.int32, (k_pad, tile_v), 1)
    wt = jnp.where(col < v_real, wt, _NEG)

    m = m_ref[...][:, 0:1]
    thr = thr_ref[...][:, 0:1]
    inv_z = invz_ref[...][:, 0:1]
    e = jnp.exp(wt - m)                                 # unnormalized beta numerators
    beta_ref[...] = (e * inv_z).astype(beta_ref.dtype)  # normalized beta tile (bf16)
    f = jnp.where(wt >= thr, e, 0.0)                    # top-k filtered (Z cancels in s)

    g_ref[...] += lax.dot_general(f, f, (((1,), (1,)), ((), ())),
                                  preferred_element_type=jnp.float32)  # [Kp,Kp]
    fp = fsum_ref[...]
    for q in range(tile_v // 128):                      # lane-partial row sums
        fp = fp + f[:, q * 128:(q + 1) * 128]
    fsum_ref[...] = fp


# ----------------------------------------------------------------------------
# Pass 3: theta (softmax over topics, computed once per batch tile) and Re
#         lane-partial accumulation, streaming f32 doc_bow + bf16 beta.
# ----------------------------------------------------------------------------
def _re_kernel(alpha_ref, beta_ref, bow_ref, theta_ref, re_ref,
               *, tile_v, tile_b, v_real, b_real):
    b = pl.program_id(0)
    vi = pl.program_id(1)

    @pl.when(vi == 0)
    def _init():
        a = alpha_ref[...]
        a = a - jnp.max(a, axis=1, keepdims=True)
        ea = jnp.exp(a)
        theta_ref[...] = ea / jnp.sum(ea, axis=1, keepdims=True)
        re_ref[...] = jnp.zeros_like(re_ref)

    theta = theta_ref[...]                               # resident output block
    beta = beta_ref[...].astype(jnp.float32)             # [Kp, tV]
    probs = jnp.dot(theta, beta, preferred_element_type=jnp.float32)  # [tB, tV]
    logp = jnp.log(jnp.maximum(probs, 1e-37))            # underflow guard only

    # Mask ragged vocab / batch regions of the un-padded f32 bow block.
    col = vi * tile_v + lax.broadcasted_iota(jnp.int32, (tile_b, tile_v), 1)
    row = b * tile_b + lax.broadcasted_iota(jnp.int32, (tile_b, tile_v), 0)
    bow = jnp.where((col < v_real) & (row < b_real), bow_ref[...], 0.0)
    contrib = logp * bow

    acc = re_ref[...]                                    # [tB,128] lane partials
    for q in range(tile_v // 128):
        acc = acc + contrib[:, q * 128:(q + 1) * 128]
    re_ref[...] = acc


# ----------------------------------------------------------------------------
# Wrapper
# ----------------------------------------------------------------------------
def generative_model_forward(alpha, doc_bow, topic_emb, word_emb, topk,
                             *, tile_v=None, tile_b=None):
    """alpha [B,K], doc_bow [B,V], topic_emb [K,E], word_emb [E,V].
    Returns (Re [B], STDR scalar, theta [B,K])."""
    B, K = alpha.shape
    K2, E = topic_emb.shape
    E2, V = word_emb.shape
    assert K2 == K and E2 == E and doc_bow.shape == (B, V)
    assert 1 <= topk <= min(V, 128)

    try:
        vmem_bytes = int(pltpu.get_tpu_info().vmem_capacity_bytes)
    except Exception:
        vmem_bytes = 64 * 1024 * 1024
    vmem_limit = int(min(vmem_bytes * 3 // 4, 96 * 1024 * 1024))

    f32, bf16 = jnp.float32, jnp.bfloat16
    Kp = _round_up(K, 16)   # bf16-friendly sublane packing for the beta output
    Ep = _round_up(E, 16)

    # Batch tile: 256 when the batch is big (matches v6e/v7x MXU M), else 128 / B.
    if tile_b is None:
        tile_b = 256 if B >= 256 else (128 if B >= 128 else _round_up(B, 8))
    tile_b = _round_up(tile_b, 8)
    n_b = pl.cdiv(B, tile_b)
    Bp = n_b * tile_b

    # Vocab tile from the per-step VMEM footprint of pass 3 (the binding pass):
    # ~ (2 double-buffered + 3 f32 intermediates) bow blocks + bf16 beta blocks.
    if tile_v is None:
        budget = (vmem_limit * 3) // 5
        tile_v = 8192
        while tile_v > 512 and tile_b * tile_v * 20 + Kp * tile_v * 8 > budget:
            tile_v //= 2
    tile_v = max(128, min(_round_up(tile_v, 128), _round_up(V, 128)))

    n_v = pl.cdiv(V, tile_v)              # real vocab tiles (pass 3)
    n_split = 2 if n_v >= 2 else 1        # dual-TensorCore split for passes 1/2
    Vp = _round_up(V, n_split * tile_v)
    n_half = Vp // (n_split * tile_v)

    # Small parameters padded + cast once; doc_bow streamed as-is (f32, no copy).
    T = jnp.zeros((Kp, Ep), bf16).at[:K, :E].set(topic_emb.astype(bf16))
    W = jnp.zeros((Ep, Vp), bf16).at[:E, :V].set(word_emb.astype(bf16))
    alpha_p = jnp.full((Bp, Kp), _NEG, f32).at[:B, :K].set(alpha.astype(f32))
    bow = doc_bow.astype(f32)

    def cparams(sem):
        return pltpu.CompilerParams(dimension_semantics=sem,
                                    vmem_limit_bytes=vmem_limit)

    t_spec = pl.BlockSpec((Kp, Ep), lambda c, v: (0, 0))
    w_spec = pl.BlockSpec((Ep, tile_v), lambda c, v: (0, c * n_half + v))
    stat_out_spec = pl.BlockSpec((None, Kp, 128), lambda c, v: (c, 0, 0))
    stat_in_spec = pl.BlockSpec((Kp, 128), lambda c, v: (0, 0))

    # ---- Pass 1: beta softmax stats + top-k candidates (per vocab half) ----
    m_out, z_out, cand_out = pl.pallas_call(
        functools.partial(_stats_kernel, topk=topk, tile_v=tile_v,
                          v_real=V, k_pad=Kp, n_half=n_half),
        out_shape=(jax.ShapeDtypeStruct((n_split, Kp, 128), f32),) * 3,
        grid=(n_split, n_half),
        in_specs=[t_spec, w_spec],
        out_specs=(stat_out_spec,) * 3,
        compiler_params=cparams(("parallel", "arbitrary")),
        cost_estimate=pl.CostEstimate(
            flops=2 * Kp * Ep * Vp,
            transcendentals=Kp * Vp,
            bytes_accessed=int(T.size) * 2 + int(W.size) * 2
                           + 3 * n_split * Kp * 128 * 4),
    )(T, W)

    # ---- Tiny JAX combine over the (<=2) vocab halves ----
    m_h = m_out[:, :, 0]                                   # [S, Kp]
    m_g = jnp.max(m_h, axis=0)                             # [Kp]
    z_g = jnp.sum(jnp.sum(z_out, axis=-1) * jnp.exp(m_h - m_g[None, :]), axis=0)
    cand_all = jnp.swapaxes(cand_out, 0, 1).reshape(Kp, -1)  # [Kp, S*128]
    kth = lax.top_k(cand_all, topk)[0][:, -1]              # k-th largest wt per row
    m_b = jnp.broadcast_to(m_g[:, None], (Kp, 128))
    thr_b = jnp.broadcast_to(kth[:, None], (Kp, 128))
    invz_b = jnp.broadcast_to((1.0 / z_g)[:, None], (Kp, 128))

    # ---- Pass 2: STDR accumulators + normalized beta (bf16) emission ----
    beta, g_out, f_out = pl.pallas_call(
        functools.partial(_stdr_kernel, tile_v=tile_v, v_real=V,
                          k_pad=Kp, n_half=n_half),
        out_shape=(jax.ShapeDtypeStruct((Kp, Vp), bf16),
                   jax.ShapeDtypeStruct((n_split, Kp, Kp), f32),
                   jax.ShapeDtypeStruct((n_split, Kp, 128), f32)),
        grid=(n_split, n_half),
        in_specs=[t_spec, w_spec, stat_in_spec, stat_in_spec, stat_in_spec],
        out_specs=(pl.BlockSpec((Kp, tile_v), lambda c, v: (0, c * n_half + v)),
                   pl.BlockSpec((None, Kp, Kp), lambda c, v: (c, 0, 0)),
                   stat_out_spec),
        compiler_params=cparams(("parallel", "arbitrary")),
        cost_estimate=pl.CostEstimate(
            flops=2 * Kp * Ep * Vp + 2 * Kp * Kp * Vp,
            transcendentals=Kp * Vp,
            bytes_accessed=int(T.size) * 2 + int(W.size) * 2 + Kp * Vp * 2
                           + n_split * Kp * (Kp + 128) * 4),
    )(T, W, m_b, thr_b, invz_b)

    # ---- STDR closed-form finalize (K x K, plain JAX; padded topics dropped) ----
    G = jnp.sum(g_out, axis=0)[:K, :K]                     # Gram of filtered f
    F = jnp.sum(f_out, axis=(0, 2))[:K]                    # row sums of f
    a = 1.0 / jnp.maximum(F, 1e-30)
    S_mat = G * a[:, None] * a[None, :]                    # Gram of normalized s_i
    sq = jnp.diagonal(S_mat)
    STDR = (K * jnp.sum(sq) - jnp.sum(S_mat)) / float(K * K)

    # ---- Pass 3: theta + Re (batch parallel, vocab reduction) ----
    theta_p, re_p = pl.pallas_call(
        functools.partial(_re_kernel, tile_v=tile_v, tile_b=tile_b,
                          v_real=V, b_real=B),
        out_shape=(jax.ShapeDtypeStruct((Bp, Kp), f32),
                   jax.ShapeDtypeStruct((Bp, 128), f32)),
        grid=(n_b, n_v),
        in_specs=[pl.BlockSpec((tile_b, Kp), lambda b, v: (b, 0)),
                  pl.BlockSpec((Kp, tile_v), lambda b, v: (0, v)),
                  pl.BlockSpec((tile_b, tile_v), lambda b, v: (b, v))],
        out_specs=(pl.BlockSpec((tile_b, Kp), lambda b, v: (b, 0)),
                   pl.BlockSpec((tile_b, 128), lambda b, v: (b, 0))),
        compiler_params=cparams(("parallel", "arbitrary")),
        cost_estimate=pl.CostEstimate(
            flops=2 * Bp * Kp * n_v * tile_v + 2 * Bp * n_v * tile_v,
            transcendentals=Bp * n_v * tile_v,
            bytes_accessed=B * V * 4 + n_b * Kp * n_v * tile_v * 2
                           + Bp * (2 * Kp + 128) * 4),
    )(alpha_p, beta, bow)

    Re = -jnp.sum(re_p[:B], axis=1)     # finish the lane-partial reduction
    theta = theta_p[:B, :K]
    return Re, STDR, theta


# ----------------------------------------------------------------------------
# Pure-JAX reference (same bf16-rounded parameters the kernel consumes).
# ----------------------------------------------------------------------------
def _reference(alpha, doc_bow, topic_emb_bf16, word_emb_bf16, topk):
    theta = jax.nn.softmax(alpha.astype(jnp.float32), axis=-1)
    wt = jnp.dot(topic_emb_bf16, word_emb_bf16, preferred_element_type=jnp.float32)
    beta = jax.nn.softmax(wt, axis=1)
    probs = jnp.dot(theta, beta, precision=lax.Precision.HIGHEST)
    Re = -jnp.sum(jnp.log(probs) * doc_bow.astype(jnp.float32), axis=-1)
    K = beta.shape[0]
    vals = jnp.sort(wt, axis=1)[:, ::-1]
    thr = vals[:, topk - 1:topk]          # threshold on wt (monotone with beta/row)
    filt = jnp.where(wt >= thr, beta, 0.0)
    s = filt / jnp.sum(filt, axis=1, keepdims=True)
    G = jnp.dot(s, s.T, precision=lax.Precision.HIGHEST)
    sq = jnp.diag(G)
    sqd = sq[:, None] + sq[None, :] - 2.0 * G
    STDR = 0.5 * jnp.sum(sqd) / (K * K)
    return Re, STDR, theta


if __name__ == "__main__":
    # Small shapes consistent with the module; deliberately exercise batch/topic
    # padding (B=6->8, K=10->16), vocab padding, the multi-tile vocab grid
    # (448 -> 4x128) and the 2-way vocab split of passes 1/2.
    B, n_topics, emb, vocab, topk = 6, 10, 32, 448, 5

    key = jax.random.PRNGKey(0)
    k_a, k_bow, k_t, k_w = jax.random.split(key, 4)

    orth = jax.nn.initializers.orthogonal()
    topic_emb = orth(k_t, (emb, n_topics), jnp.float32).T      # [n_topics, emb]
    word_emb = orth(k_w, (emb, vocab), jnp.float32)            # [emb, vocab]
    alpha = jax.random.normal(k_a, (B, n_topics), jnp.float32)
    doc_bow = jax.random.randint(k_bow, (B, vocab), 0, 5).astype(jnp.float32)

    Re, STDR, theta = generative_model_forward(
        alpha, doc_bow, topic_emb, word_emb, topk, tile_v=128)
    jax.block_until_ready((Re, STDR, theta))

    Tb = topic_emb.astype(jnp.bfloat16)
    Wb = word_emb.astype(jnp.bfloat16)
    Re_r, STDR_r, theta_r = _reference(alpha, doc_bow, Tb, Wb, topk)

    assert jnp.allclose(theta, theta_r, rtol=1e-4, atol=1e-5), "theta mismatch"
    assert jnp.allclose(Re, Re_r, rtol=5e-3, atol=1e-2), "Re mismatch"
    assert jnp.allclose(STDR, STDR_r, rtol=5e-3, atol=1e-6), "STDR mismatch"
    print("KERNEL_OK")
</pallas_src>

<mosaic_0001>
module attributes {stable_mosaic.version = 11 : i64} {
  func.func @_stats_kernel(%arg0: i32, %arg1: i32, %arg2: memref<16x32xbf16, #tpu.memory_space<vmem>>, %arg3: memref<32x128xbf16, #tpu.memory_space<vmem>>, %arg4: memref<1x16x128xf32, #tpu.memory_space<vmem>>, %arg5: memref<1x16x128xf32, #tpu.memory_space<vmem>>, %arg6: memref<1x16x128xf32, #tpu.memory_space<vmem>>) attributes {dimension_semantics = [#tpu.dimension_semantics<parallel>, #tpu.dimension_semantics<arbitrary>], iteration_bounds = array<i64: 2, 2>, scalar_prefetch = 0 : i64, scratch_operands = 0 : i64, tpu.core_type = #tpu.core_type<tc>, window_params = [{pipeline_mode = #tpu.pipeline_mode<synchronous>, transform_indices = @transform_0, window_bounds = array<i64: 16, 32>}, {transform_indices = @transform_1, window_bounds = array<i64: 32, 128>}, {transform_indices = @transform_2, window_bounds = array<i64: 1, 16, 128>}, {transform_indices = @transform_3, window_bounds = array<i64: 1, 16, 128>}, {transform_indices = @transform_4, window_bounds = array<i64: 1, 16, 128>}]} {
    %c0_i32 = arith.constant 0 : i32
    %0 = arith.cmpi eq, %arg1, %c0_i32 : i32
    %1 = arith.extui %0 : i1 to i32
    %c0_i32_0 = arith.constant 0 : i32
    %2 = arith.cmpi ne, %1, %c0_i32_0 : i32
    scf.if %2 {
      %cst_47 = arith.constant -1.000000e+30 : f32
      %135 = vector.broadcast %cst_47 : f32 to vector<16x128xf32>
      %c0_48 = arith.constant 0 : index
      %c0_49 = arith.constant 0 : index
      %c0_50 = arith.constant 0 : index
      %136 = vector.load %arg4[%c0_48, %c0_49, %c0_50] : memref<1x16x128xf32, #tpu.memory_space<vmem>>, vector<1x16x128xf32>
      %137 = vector.shape_cast %136 : vector<1x16x128xf32> to vector<16x128xf32>
      %138 = vector.shape_cast %135 : vector<16x128xf32> to vector<1x16x128xf32>
      tpu.vector_store %arg4[%c0_48, %c0_49, %c0_50], %138 {strides = array<i32>} : memref<1x16x128xf32, #tpu.memory_space<vmem>>, vector<1x16x128xf32>,
      %cst_51 = arith.constant 0.000000e+00 : f32
      %139 = vector.broadcast %cst_51 : f32 to vector<16x128xf32>
      %c0_52 = arith.constant 0 : index
      %c0_53 = arith.constant 0 : index
      %c0_54 = arith.constant 0 : index
      %140 = vector.load %arg5[%c0_52, %c0_53, %c0_54] : memref<1x16x128xf32, #tpu.memory_space<vmem>>, vector<1x16x128xf32>
      %141 = vector.shape_cast %140 : vector<1x16x128xf32> to vector<16x128xf32>
      %142 = vector.shape_cast %139 : vector<16x128xf32> to vector<1x16x128xf32>
      tpu.vector_store %arg5[%c0_52, %c0_53, %c0_54], %142 {strides = array<i32>} : memref<1x16x128xf32, #tpu.memory_space<vmem>>, vector<1x16x128xf32>,
      %cst_55 = arith.constant -1.000000e+30 : f32
      %143 = vector.broadcast %cst_55 : f32 to vector<16x128xf32>
      %c0_56 = arith.constant 0 : index
      %c0_57 = arith.constant 0 : index
      %c0_58 = arith.constant 0 : index
      %144 = vector.load %arg6[%c0_56, %c0_57, %c0_58] : memref<1x16x128xf32, #tpu.memory_space<vmem>>, vector<1x16x128xf32>
      %145 = vector.shape_cast %144 : vector<1x16x128xf32> to vector<16x128xf32>
      %146 = vector.shape_cast %143 : vector<16x128xf32> to vector<1x16x128xf32>
      tpu.vector_store %arg6[%c0_56, %c0_57, %c0_58], %146 {strides = array<i32>} : memref<1x16x128xf32, #tpu.memory_space<vmem>>, vector<1x16x128xf32>,
    } else {
    }
    %c0 = arith.constant 0 : index
    %c0_1 = arith.constant 0 : index
    %3 = vector.load %arg2[%c0, %c0_1] : memref<16x32xbf16, #tpu.memory_space<vmem>>, vector<16x32xbf16>
    %c0_2 = arith.constant 0 : index
    %c0_3 = arith.constant 0 : index
    %4 = vector.load %arg3[%c0_2, %c0_3] : memref<32x128xbf16, #tpu.memory_space<vmem>>, vector<32x128xbf16>
    %cst = arith.constant dense<0.000000e+00> : vector<16x128xf32>
    %5 = tpu.matmul %3, %4, %cst {dimension_numbers = #tpu.dot_dimension_numbers<[1], [0], [0], [1], [0, 0, 1, 1], [], []>} : vector<16x32xbf16>, vector<32x128xbf16>, vector<16x128xf32> -> vector<16x128xf32>
    %c2_i32 = arith.constant 2 : i32
    %6 = arith.muli %arg0, %c2_i32 : i32
    %7 = arith.addi %6, %arg1 : i32
    %c128_i32 = arith.constant 128 : i32
    %8 = arith.muli %7, %c128_i32 : i32
    %9 = tpu.iota {dimensions = array<i32: 1>} : vector<16x128xi32>
    %10 = vector.broadcast %8 : i32 to vector<16x128xi32>
    %11 = arith.addi %10, %9 : vector<16x128xi32>
    %c448_i32 = arith.constant 448 : i32
    %12 = vector.broadcast %c448_i32 : i32 to vector<16x128xi32>
    %13 = arith.cmpi slt, %11, %12 : vector<16x128xi32>
    %cst_4 = arith.constant -1.000000e+30 : f32
    %14 = vector.broadcast %cst_4 : f32 to vector<16x128xf32>
    %15 = arith.select %13, %5, %14 : vector<16x128xi1>, vector<16x128xf32>
    %c0_5 = arith.constant 0 : index
    %c0_6 = arith.constant 0 : index
    %c0_7 = arith.constant 0 : index
    %16 = vector.load %arg4[%c0_5, %c0_6, %c0_7] : memref<1x16x128xf32, #tpu.memory_space<vmem>>, vector<1x16x128xf32>
    %17 = vector.shape_cast %16 : vector<1x16x128xf32> to vector<16x128xf32>
    %cst_8 = arith.constant dense<0xFF800000> : vector<16xf32>
    %18 = vector.multi_reduction <maximumf>, %15, %cst_8 [1] : vector<16x128xf32> to vector<16xf32>
    %19 = vector.shape_cast %18 : vector<16xf32> to vector<16x1xf32>
    %20 = vector.broadcast %19 : vector<16x1xf32> to vector<16x128xf32>
    %21 = arith.maximumf %17, %20 : vector<16x128xf32>
    %22 = vector.extract_strided_slice %21 {offsets = [0, 0], sizes = [16, 1], strides = [1, 1]} : vector<16x128xf32> to vector<16x1xf32>
    %23 = vector.broadcast %22 : vector<16x1xf32> to vector<16x128xf32>
    %24 = arith.subf %15, %23 : vector<16x128xf32>
    %25 = math.exp %24 : vector<16x128xf32>
    %c0_9 = arith.constant 0 : index
    %c0_10 = arith.constant 0 : index
    %c0_11 = arith.constant 0 : index
    %26 = vector.load %arg5[%c0_9, %c0_10, %c0_11] : memref<1x16x128xf32, #tpu.memory_space<vmem>>, vector<1x16x128xf32>
    %27 = vector.shape_cast %26 : vector<1x16x128xf32> to vector<16x128xf32>
    %28 = arith.subf %17, %21 : vector<16x128xf32>
    %29 = math.exp %28 : vector<16x128xf32>
    %30 = arith.mulf %27, %29 : vector<16x128xf32>
    %31 = arith.addf %30, %25 : vector<16x128xf32>
    %c0_12 = arith.constant 0 : index
    %c0_13 = arith.constant 0 : index
    %c0_14 = arith.constant 0 : index
    %32 = vector.load %arg5[%c0_12, %c0_13, %c0_14] : memref<1x16x128xf32, #tpu.memory_space<vmem>>, vector<1x16x128xf32>
    %33 = vector.shape_cast %32 : vector<1x16x128xf32> to vector<16x128xf32>
    %34 = vector.shape_cast %31 : vector<16x128xf32> to vector<1x16x128xf32>
    tpu.vector_store %arg5[%c0_12, %c0_13, %c0_14], %34 {strides = array<i32>} : memref<1x16x128xf32, #tpu.memory_space<vmem>>, vector<1x16x128xf32>,
    %c0_15 = arith.constant 0 : index
    %c0_16 = arith.constant 0 : index
    %c0_17 = arith.constant 0 : index
    %35 = vector.load %arg4[%c0_15, %c0_16, %c0_17] : memref<1x16x128xf32, #tpu.memory_space<vmem>>, vector<1x16x128xf32>
    %36 = vector.shape_cast %35 : vector<1x16x128xf32> to vector<16x128xf32>
    %37 = vector.shape_cast %21 : vector<16x128xf32> to vector<1x16x128xf32>
    tpu.vector_store %arg4[%c0_15, %c0_16, %c0_17], %37 {strides = array<i32>} : memref<1x16x128xf32, #tpu.memory_space<vmem>>, vector<1x16x128xf32>,
    %38 = tpu.iota {dimensions = array<i32: 1>} : vector<16x128xi32>
    %c0_18 = arith.constant 0 : index
    %c0_19 = arith.constant 0 : index
    %c0_20 = arith.constant 0 : index
    %39 = vector.load %arg6[%c0_18, %c0_19, %c0_20] : memref<1x16x128xf32, #tpu.memory_space<vmem>>, vector<1x16x128xf32>
    %40 = vector.shape_cast %39 : vector<1x16x128xf32> to vector<16x128xf32>
    %cst_21 = arith.constant -1.000000e+30 : f32
    %41 = vector.broadcast %cst_21 : f32 to vector<16x128xf32>
    %c0_i32_22 = arith.constant 0 : i32
    %cst_23 = arith.constant dense<0xFF800000> : vector<16xf32>
    %42 = vector.multi_reduction <maximumf>, %40, %cst_23 [1] : vector<16x128xf32> to vector<16xf32>
    %43 = vector.shape_cast %42 : vector<16xf32> to vector<16x1xf32>
    %cst_24 = arith.constant dense<0xFF800000> : vector<16xf32>
    %44 = vector.multi_reduction <maximumf>, %15, %cst_24 [1] : vector<16x128xf32> to vector<16xf32>
    %45 = vector.shape_cast %44 : vector<16xf32> to vector<16x1xf32>
    %46 = arith.maximumf %43, %45 : vector<16x1xf32>
    %47 = vector.broadcast %c0_i32_22 : i32 to vector<16x128xi32>
    %48 = arith.cmpi eq, %38, %47 : vector<16x128xi32>
    %49 = vector.shape_cast %46 : vector<16x1xf32> to vector<16x1xf32>
    %50 = vector.broadcast %49 : vector<16x1xf32> to vector<16x128xf32>
    %51 = arith.select %48, %50, %41 : vector<16x128xi1>, vector<16x128xf32>
    %52 = vector.broadcast %46 : vector<16x1xf32> to vector<16x128xf32>
    %53 = arith.cmpf oge, %40, %52 : vector<16x128xf32>
    %cst_25 = arith.constant -1.000000e+30 : f32
    %54 = vector.broadcast %cst_25 : f32 to vector<16x128xf32>
    %55 = arith.select %53, %54, %40 : vector<16x128xi1>, vector<16x128xf32>
    %56 = vector.broadcast %46 : vector<16x1xf32> to vector<16x128xf32>
    %57 = arith.cmpf oge, %15, %56 : vector<16x128xf32>
    %cst_26 = arith.constant -1.000000e+30 : f32
    %58 = vector.broadcast %cst_26 : f32 to vector<16x128xf32>
    %59 = arith.select %57, %58, %15 : vector<16x128xi1>, vector<16x128xf32>
    %c1_i32 = arith.constant 1 : i32
    %cst_27 = arith.constant dense<0xFF800000> : vector<16xf32>
    %60 = vector.multi_reduction <maximumf>, %55, %cst_27 [1] : vector<16x128xf32> to vector<16xf32>
    %61 = vector.shape_cast %60 : vector<16xf32> to vector<16x1xf32>
    %cst_28 = arith.constant dense<0xFF800000> : vector<16xf32>
    %62 = vector.multi_reduction <maximumf>, %59, %cst_28 [1] : vector<16x128xf32> to vector<16xf32>
    %63 = vector.shape_cast %62 : vector<16xf32> to vector<16x1xf32>
    %64 = arith.maximumf %61, %63 : vector<16x1xf32>
    %65 = vector.broadcast %c1_i32 : i32 to vector<16x128xi32>
    %66 = arith.cmpi eq, %38, %65 : vector<16x128xi32>
    %67 = vector.shape_cast %64 : vector<16x1xf32> to vector<16x1xf32>
    %68 = vector.broadcast %67 : vector<16x1xf32> to vector<16x128xf32>
    %69 = arith.select %66, %68, %51 : vector<16x128xi1>, vector<16x128xf32>
    %70 = vector.broadcast %64 : vector<16x1xf32> to vector<16x128xf32>
    %71 = arith.cmpf oge, %55, %70 : vector<16x128xf32>
    %cst_29 = arith.constant -1.000000e+30 : f32
    %72 = vector.broadcast %cst_29 : f32 to vector<16x128xf32>
    %73 = arith.select %71, %72, %55 : vector<16x128xi1>, vector<16x128xf32>
    %74 = vector.broadcast %64 : vector<16x1xf32> to vector<16x128xf32>
    %75 = arith.cmpf oge, %59, %74 : vector<16x128xf32>
    %cst_30 = arith.constant -1.000000e+30 : f32
    %76 = vector.broadcast %cst_30 : f32 to vector<16x128xf32>
    %77 = arith.select %75, %76, %59 : vector<16x128xi1>, vector<16x128xf32>
    %c2_i32_31 = arith.constant 2 : i32
    %cst_32 = arith.constant dense<0xFF800000> : vector<16xf32>
    %78 = vector.multi_reduction <maximumf>, %73, %cst_32 [1] : vector<16x128xf32> to vector<16xf32>
    %79 = vector.shape_cast %78 : vector<16xf32> to vector<16x1xf32>
    %cst_33 = arith.constant dense<0xFF800000> : vector<16xf32>
    %80 = vector.multi_reduction <maximumf>, %77, %cst_33 [1] : vector<16x128xf32> to vector<16xf32>
    %81 = vector.shape_cast %80 : vector<16xf32> to vector<16x1xf32>
    %82 = arith.maximumf %79, %81 : vector<16x1xf32>
    %83 = vector.broadcast %c2_i32_31 : i32 to vector<16x128xi32>
    %84 = arith.cmpi eq, %38, %83 : vector<16x128xi32>
    %85 = vector.shape_cast %82 : vector<16x1xf32> to vector<16x1xf32>
    %86 = vector.broadcast %85 : vector<16x1xf32> to vector<16x128xf32>
    %87 = arith.select %84, %86, %69 : vector<16x128xi1>, vector<16x128xf32>
    %88 = vector.broadcast %82 : vector<16x1xf32> to vector<16x128xf32>
    %89 = arith.cmpf oge, %73, %88 : vector<16x128xf32>
    %cst_34 = arith.constant -1.000000e+30 : f32
    %90 = vector.broadcast %cst_34 : f32 to vector<16x128xf32>
    %91 = arith.select %89, %90, %73 : vector<16x128xi1>, vector<16x128xf32>
    %92 = vector.broadcast %82 : vector<16x1xf32> to vector<16x128xf32>
    %93 = arith.cmpf oge, %77, %92 : vector<16x128xf32>
    %cst_35 = arith.constant -1.000000e+30 : f32
    %94 = vector.broadcast %cst_35 : f32 to vector<16x128xf32>
    %95 = arith.select %93, %94, %77 : vector<16x128xi1>, vector<16x128xf32>
    %c3_i32 = arith.constant 3 : i32
    %cst_36 = arith.constant dense<0xFF800000> : vector<16xf32>
    %96 = vector.multi_reduction <maximumf>, %91, %cst_36 [1] : vector<16x128xf32> to vector<16xf32>
    %97 = vector.shape_cast %96 : vector<16xf32> to vector<16x1xf32>
    %cst_37 = arith.constant dense<0xFF800000> : vector<16xf32>
    %98 = vector.multi_reduction <maximumf>, %95, %cst_37 [1] : vector<16x128xf32> to vector<16xf32>
    %99 = vector.shape_cast %98 : vector<16xf32> to vector<16x1xf32>
    %100 = arith.maximumf %97, %99 : vector<16x1xf32>
    %101 = vector.broadcast %c3_i32 : i32 to vector<16x128xi32>
    %102 = arith.cmpi eq, %38, %101 : vector<16x128xi32>
    %103 = vector.shape_cast %100 : vector<16x1xf32> to vector<16x1xf32>
    %104 = vector.broadcast %103 : vector<16x1xf32> to vector<16x128xf32>
    %105 = arith.select %102, %104, %87 : vector<16x128xi1>, vector<16x128xf32>
    %106 = vector.broadcast %100 : vector<16x1xf32> to vector<16x128xf32>
    %107 = arith.cmpf oge, %91, %106 : vector<16x128xf32>
    %cst_38 = arith.constant -1.000000e+30 : f32
    %108 = vector.broadcast %cst_38 : f32 to vector<16x128xf32>
    %109 = arith.select %107, %108, %91 : vector<16x128xi1>, vector<16x128xf32>
    %110 = vector.broadcast %100 : vector<16x1xf32> to vector<16x128xf32>
    %111 = arith.cmpf oge, %95, %110 : vector<16x128xf32>
    %cst_39 = arith.constant -1.000000e+30 : f32
    %112 = vector.broadcast %cst_39 : f32 to vector<16x128xf32>
    %113 = arith.select %111, %112, %95 : vector<16x128xi1>, vector<16x128xf32>
    %c4_i32 = arith.constant 4 : i32
    %cst_40 = arith.constant dense<0xFF800000> : vector<16xf32>
    %114 = vector.multi_reduction <maximumf>, %109, %cst_40 [1] : vector<16x128xf32> to vector<16xf32>
    %115 = vector.shape_cast %114 : vector<16xf32> to vector<16x1xf32>
    %cst_41 = arith.constant dense<0xFF800000> : vector<16xf32>
    %116 = vector.multi_reduction <maximumf>, %113, %cst_41 [1] : vector<16x128xf32> to vector<16xf32>
    %117 = vector.shape_cast %116 : vector<16xf32> to vector<16x1xf32>
    %118 = arith.maximumf %115, %117 : vector<16x1xf32>
    %119 = vector.broadcast %c4_i32 : i32 to vector<16x128xi32>
    %120 = arith.cmpi eq, %38, %119 : vector<16x128xi32>
    %121 = vector.shape_cast %118 : vector<16x1xf32> to vector<16x1xf32>
    %122 = vector.broadcast %121 : vector<16x1xf32> to vector<16x128xf32>
    %123 = arith.select %120, %122, %105 : vector<16x128xi1>, vector<16x128xf32>
    %124 = vector.broadcast %118 : vector<16x1xf32> to vector<16x128xf32>
    %125 = arith.cmpf oge, %109, %124 : vector<16x128xf32>
    %cst_42 = arith.constant -1.000000e+30 : f32
    %126 = vector.broadcast %cst_42 : f32 to vector<16x128xf32>
    %127 = arith.select %125, %126, %109 : vector<16x128xi1>, vector<16x128xf32>
    %128 = vector.broadcast %118 : vector<16x1xf32> to vector<16x128xf32>
    %129 = arith.cmpf oge, %113, %128 : vector<16x128xf32>
    %cst_43 = arith.constant -1.000000e+30 : f32
    %130 = vector.broadcast %cst_43 : f32 to vector<16x128xf32>
    %131 = arith.select %129, %130, %113 : vector<16x128xi1>, vector<16x128xf32>
    %c5_i32 = arith.constant 5 : i32
    %c0_44 = arith.constant 0 : index
    %c0_45 = arith.constant 0 : index
    %c0_46 = arith.constant 0 : index
    %132 = vector.load %arg6[%c0_44, %c0_45, %c0_46] : memref<1x16x128xf32, #tpu.memory_space<vmem>>, vector<1x16x128xf32>
    %133 = vector.shape_cast %132 : vector<1x16x128xf32> to vector<16x128xf32>
    %134 = vector.shape_cast %123 : vector<16x128xf32> to vector<1x16x128xf32>
    tpu.vector_store %arg6[%c0_44, %c0_45, %c0_46], %134 {strides = array<i32>} : memref<1x16x128xf32, #tpu.memory_space<vmem>>, vector<1x16x128xf32>,
    return
  }
  func.func @transform_0(%arg0: i32, %arg1: i32) -> (i32, i32) {
    %c0_i32 = arith.constant 0 : i32
    %c0_i32_0 = arith.constant 0 : i32
    %c0_i32_1 = arith.constant 0 : i32
    return %c0_i32, %c0_i32_0 : i32, i32
  }
  func.func @transform_1(%arg0: i32, %arg1: i32) -> (i32, i32) {
    %c2_i32 = arith.constant 2 : i32
    %0 = arith.muli %arg0, %c2_i32 : i32
    %1 = arith.addi %0, %arg1 : i32
    %c0_i32 = arith.constant 0 : i32
    %c0_i32_0 = arith.constant 0 : i32
    return %c0_i32, %1 : i32, i32
  }
  func.func @transform_2(%arg0: i32, %arg1: i32) -> (i32, i32, i32) {
    %c0_i32 = arith.constant 0 : i32
    %c0_i32_0 = arith.constant 0 : i32
    %c0_i32_1 = arith.constant 0 : i32
    return %arg0, %c0_i32, %c0_i32_0 : i32, i32, i32
  }
  func.func @transform_3(%arg0: i32, %arg1: i32) -> (i32, i32, i32) {
    %c0_i32 = arith.constant 0 : i32
    %c0_i32_0 = arith.constant 0 : i32
    %c0_i32_1 = arith.constant 0 : i32
    return %arg0, %c0_i32, %c0_i32_0 : i32, i32, i32
  }
  func.func @transform_4(%arg0: i32, %arg1: i32) -> (i32, i32, i32) {
    %c0_i32 = arith.constant 0 : i32
    %c0_i32_0 = arith.constant 0 : i32
    %c0_i32_1 = arith.constant 0 : i32
    return %arg0, %c0_i32, %c0_i32_0 : i32, i32, i32
  }
}

</mosaic_0001>

<llo_original>
// kernel: tpu_custom_call.1
$region0: #{tpu_custom_call.1}
  #allocation0 [shape = 'u32[]', space=smem, size = 0x4, offset = 0x4, fixed_abs, tag = 'smem constant byte address 0x4 - core index']
  #allocation1 [shape = 'u32[144,128]{1,0:T(1,128)}', space=vmem, size = 0x12000, scoped, tag = 'internal scratch']
  %s0 = inlined_call_operand.hbm [shape: bf16[16,32], index: 0, kind: input, shape index: {}]
  %s1 = inlined_call_operand.hbm [shape: bf16[32,512], index: 1, kind: input, shape index: {}]
  %s2 = inlined_call_operand.hbm [shape: f32[2,16,128], index: 2, kind: output, shape index: {0}]
  %s3 = inlined_call_operand.hbm [shape: f32[2,16,128], index: 3, kind: output, shape index: {1}]
  %s4 = inlined_call_operand.hbm [shape: f32[2,16,128], index: 4, kind: output, shape index: {2}]
  %5 = xla_tuple %s2, %s3, %s4
  %s6 = sld [smem:[#allocation0]]
  $region69: #{tpu_custom_call.1} parent=0
    _
  %s8 = ssub.s32 1, %s6
  %s9 = scalar_select 0, %s8, %s6
  $region1: #{tpu_custom_call.1} parent=0
    #allocation2 [shape = 'u8[4096]{0}', space=vmem, size = 0x1000, scoped, tag = 'input window, operand 0, single buffered']
    #allocation3 [shape = 's32[2]{0}', space=sflag, size = 0x8, scoped, tag = 'scoped memory for tpu_custom_call.1']
    #allocation4 [shape = 's32[2]{0}', space=sflag, size = 0x8, scoped, tag = 'scoped memory for tpu_custom_call.1']
    #allocation5 [shape = 'u8[16384]{0}', space=vmem, size = 0x4000, scoped, tag = 'input window, operand 1']
    #allocation6 [shape = 's32[2]{0}', space=sflag, size = 0x8, scoped, tag = 'scoped memory for tpu_custom_call.1']
    #allocation7 [shape = 'u8[16384]{0}', space=vmem, size = 0x4000, scoped, tag = 'output window, operand 0']
    #allocation8 [shape = 'u8[16384]{0}', space=vmem, size = 0x4000, scoped, tag = 'output window, operand 1']
    #allocation9 [shape = 's32[2]{0}', space=sflag, size = 0x8, scoped, tag = 'scoped memory for tpu_custom_call.1']
    #allocation10 [shape = 'u8[16384]{0}', space=vmem, size = 0x4000, scoped, tag = 'output window, operand 2']
    %10 = vsyncpa [#allocation3], 0
    %11 = vsyncpa [#allocation6], 0
    %s12 = scalar_lea.sflag [#allocation6], 1
    %13 = vsyncpa %s12, 0
    %14 = vsyncpa [#allocation4], 0
    %s15 = scalar_lea.sflag [#allocation4], 1
    %16 = vsyncpa %s15, 0
    %17 = vsyncpa [#allocation9], 0
    %s18 = scalar_lea.sflag [#allocation9], 1
    %19 = vsyncpa %s18, 0
    loop: start=0, step=1, limit=6
    $region2: #{tpu_custom_call.1} parent=1 // loop_pre_header
      _
    $region3: #{tpu_custom_call.1} parent=1 // loop_header
      %s21 = sphi 0, %s25
      %p22 = scmp.ge.s32.totalorder %s21, 6
      %s28 = sphi 0, %s40
      %s29 = sphi 0, %s36
      %s30 = sphi 0, %s28
      %s31 = sphi 0, %s29
      %s32 = sphi 0, %s30
      %s33 = sphi 0, %s31
      %s41 = sphi 0, %s41
      %s43 = sphi 0, %s41
      %s44 = sphi 0, %s43
      %s58 = sphi 0, %s44
      %s68 = sphi 0, %s70
      %s71 = sphi 0, %s68
      %s72 = sphi 0, %s71
      %s88 = sphi 0, %s72
      %s94 = sphi 0, %s96
      %s97 = sphi 0, %s94
      %s98 = sphi 0, %s97
      %s114 = sphi 0, %s98
      %s120 = sphi 0, %s122
      %s123 = sphi 0, %s120
      %s124 = sphi 0, %s123
      %s140 = sphi 0, %s124
      %s146 = sphi 0, %s148
      %s149 = sphi 0, %s146
      %s150 = sphi 0, %s149
      %s166 = sphi 0, %s150
    $region4: #{tpu_custom_call.1} parent=1 // loop_header_branch
      %24 = sbr.rel (%p22) target = $region8
    $region5: #{tpu_custom_call.1} parent=1 // loop_body
      %s26 = ssub.s32 %s21, 1
      %s27 = ssub.s32 %s21, 2
      %s34 = sadd.s32 1, %s29
      %p35 = scmp.ge.s32.totalorder %s34, 2
      %s36 = scalar_select %p35, 0, %s34
      %s37 = sadd.s32 1, %s28
      %s38 = scalar_select %p35, %s37, %s28
      %p39 = scmp.ge.s32.totalorder %s38, 2
      %s40 = scalar_select %p39, 0, %s38
      %s42 = sadd.s32 %s41, 1
      %p45 = scmp.eq.s32.totalorder %s21, 3
      %p46 = scmp.ne.s32.totalorder %s41, %s43
      %p47 = scmp.eq.s32.totalorder %s21, 0
      %p48 = por %p46, %p47
      %p49 = scmp.ne.s32.totalorder %s41, %s43
      %p50 = scmp.eq.s32.totalorder %s26, 3
      %p51 = por %p49, %p50
      %p52 = scmp.ne.s32.totalorder %s43, %s44
      %p53 = scmp.eq.s32.totalorder %s26, 0
      %p54 = por %p52, %p53
      %p55 = scmp.ne.s32.totalorder %s43, %s44
      %p56 = scmp.eq.s32.totalorder %s27, 3
      %p57 = por %p55, %p56
      %p59 = scmp.ne.s32.totalorder %s44, %s58
      %p60 = scmp.eq.s32.totalorder %s27, 0
      %p61 = por %p59, %p60
      %s62 = smul.u32 %s28, 2
      %s63 = sadd.s32 %s62, %s29
      %s64 = smul.u32 %s40, 2
      %s65 = sadd.s32 %s64, %s36
      %s66 = ssub.s32 %s63, %s65
      %p67 = scmp.eq.s32.totalorder %s66, 0
      %s69 = sadd.s32 %s68, 1
      %s70 = scalar_select %p67, %s68, %s69
      %p73 = pneg %p67
      %p74 = scmp.eq.s32.totalorder %s21, 3
      %p75 = por %p73, %p74
      %p76 = scmp.ne.s32.totalorder %s68, %s71
      %p77 = scmp.eq.s32.totalorder %s21, 0
      %p78 = por %p76, %p77
      %p79 = scmp.ne.s32.totalorder %s68, %s71
      %p80 = scmp.eq.s32.totalorder %s26, 3
      %p81 = por %p79, %p80
      %p82 = scmp.ne.s32.totalorder %s71, %s72
      %p83 = scmp.eq.s32.totalorder %s26, 0
      %p84 = por %p82, %p83
      %p85 = scmp.ne.s32.totalorder %s71, %s72
      %p86 = scmp.eq.s32.totalorder %s27, 3
      %p87 = por %p85, %p86
      %p89 = scmp.ne.s32.totalorder %s72, %s88
      %p90 = scmp.eq.s32.totalorder %s27, 0
      %p91 = por %p89, %p90
      %s92 = ssub.s32 %s28, %s40
      %p93 = scmp.eq.s32.totalorder %s92, 0
      %s95 = sadd.s32 %s94, 1
      %s96 = scalar_select %p93, %s94, %s95
      %p99 = pneg %p93
      %p100 = scmp.eq.s32.totalorder %s21, 3
      %p101 = por %p99, %p100
      %p102 = scmp.ne.s32.totalorder %s94, %s97
      %p103 = scmp.eq.s32.totalorder %s21, 0
      %p104 = por %p102, %p103
      %p105 = scmp.ne.s32.totalorder %s94, %s97
      %p106 = scmp.eq.s32.totalorder %s26, 3
      %p107 = por %p105, %p106
      %p108 = scmp.ne.s32.totalorder %s97, %s98
      %p109 = scmp.eq.s32.totalorder %s26, 0
      %p110 = por %p108, %p109
      %p111 = scmp.ne.s32.totalorder %s97, %s98
      %p112 = scmp.eq.s32.totalorder %s27, 3
      %p113 = por %p111, %p112
      %p115 = scmp.ne.s32.totalorder %s98, %s114
      %p116 = scmp.eq.s32.totalorder %s27, 0
      %p117 = por %p115, %p116
      %s118 = ssub.s32 %s28, %s40
      %p119 = scmp.eq.s32.totalorder %s118, 0
      %s121 = sadd.s32 %s120, 1
      %s122 = scalar_select %p119, %s120, %s121
      %p125 = pneg %p119
      %p126 = scmp.eq.s32.totalorder %s21, 3
      %p127 = por %p125, %p126
      %p128 = scmp.ne.s32.totalorder %s120, %s123
      %p129 = scmp.eq.s32.totalorder %s21, 0
      %p130 = por %p128, %p129
      %p131 = scmp.ne.s32.totalorder %s120, %s123
      %p132 = scmp.eq.s32.totalorder %s26, 3
      %p133 = por %p131, %p132
      %p134 = scmp.ne.s32.totalorder %s123, %s124
      %p135 = scmp.eq.s32.totalorder %s26, 0
      %p136 = por %p134, %p135
      %p137 = scmp.ne.s32.totalorder %s123, %s124
      %p138 = scmp.eq.s32.totalorder %s27, 3
      %p139 = por %p137, %p138
      %p141 = scmp.ne.s32.totalorder %s124, %s140
      %p142 = scmp.eq.s32.totalorder %s27, 0
      %p143 = por %p141, %p142
      %s144 = ssub.s32 %s28, %s40
      %p145 = scmp.eq.s32.totalorder %s144, 0
      %s147 = sadd.s32 %s146, 1
      %s148 = scalar_select %p145, %s146, %s147
      %p151 = pneg %p145
      %p152 = scmp.eq.s32.totalorder %s21, 3
      %p153 = por %p151, %p152
      %p154 = scmp.ne.s32.totalorder %s146, %s149
      %p155 = scmp.eq.s32.totalorder %s21, 0
      %p156 = por %p154, %p155
      %p157 = scmp.ne.s32.totalorder %s146, %s149
      %p158 = scmp.eq.s32.totalorder %s26, 3
      %p159 = por %p157, %p158
      %p160 = scmp.ne.s32.totalorder %s149, %s150
      %p161 = scmp.eq.s32.totalorder %s26, 0
      %p162 = por %p160, %p161
      %p163 = scmp.ne.s32.totalorder %s149, %s150
      %p164 = scmp.eq.s32.totalorder %s27, 3
      %p165 = por %p163, %p164
      %p167 = scmp.ne.s32.totalorder %s150, %s166
      %p168 = scmp.eq.s32.totalorder %s27, 0
      %p169 = por %p167, %p168
      %p170 = scmp.le.s32.totalorder 1, %s21
      %p171 = scmp.lt.s32.totalorder %s21, 5
      %p172 = pnand %p170, %p171
      %p173 = pneg %p172
      // Predicated region
      $region9: #{tpu_custom_call.1} parent=5 // pred_check
        _
      $region10: #{tpu_custom_call.1} parent=5 // pred_check_branch
        %175 = sbr.rel (%p172) target = $region12
      $region11: #{tpu_custom_call.1} parent=5 // pred_region
        %s176 = ssub.s32 %s21, 1
        // Predicated region
        $region13: #{tpu_custom_call.1} parent=11 // pred_check
          %p177 = pneg %p54
        $region14: #{tpu_custom_call.1} parent=11 // pred_check_branch
          %179 = sbr.rel (%p177) target = $region16
        $region15: #{tpu_custom_call.1} parent=11 // pred_region
          %s181 = ssub.s32 128, 128
          %182 = vsyncadd [#allocation3], %s181
          %s183 = sshll.u32 [#allocation2], 4
          %s184 = int_to_ptr.vmem [resolvable:$true] %s183
          %189 = dma.hbm_to_vmem [thread:$0]  %s0, 128, %s184, [#allocation3], 64, 64, 4
        $region16: #{tpu_custom_call.1} parent=11 // pred_fallthru
          _
      $region12: #{tpu_custom_call.1} parent=5 // pred_fallthru
        _
      %p190 = scmp.lt.s32.totalorder %s21, 4
      // Predicated region
      $region17: #{tpu_custom_call.1} parent=5 // pred_check
        %p191 = pneg %p190
      $region18: #{tpu_custom_call.1} parent=5 // pred_check_branch
        %193 = sbr.rel (%p191) target = $region20
      $region19: #{tpu_custom_call.1} parent=5 // pred_region
        // Predicated region
        $region21: #{tpu_custom_call.1} parent=19 // pred_check
          %p194 = pneg %p78
        $region22: #{tpu_custom_call.1} parent=19 // pred_check_branch
          %196 = sbr.rel (%p194) target = $region24
        $region23: #{tpu_custom_call.1} parent=19 // pred_region
          %s197 = sand.u32 %s68, 1
          %s198 = scalar_lea.sflag [#allocation6], %s197
          %s199 = sand.u32 %s68, 1
          %s200 = smul.addr %s199, 16
          %s201 = scalar_lea.vmem [#allocation5], %s200
          %s202 = smul.u32 %s28, 2
          %s203 = sadd.s32 %s202, %s29
          %s205 = ssub.s32 256, 256
          %206 = vsyncadd %s198, %s205
          %s207 = smul.addr %s203, 64
          %s208 = scalar_lea.hbm %s1, %s207
          %s209 = sshll.u32 %s201, 4
          %s210 = int_to_ptr.vmem [resolvable:$true] %s209
          %215 = dma.hbm_to_vmem [thread:$0]  %s208, 256, %s210, %s198, 256, 64, 4
        $region24: #{tpu_custom_call.1} parent=19 // pred_fallthru
          _
      $region20: #{tpu_custom_call.1} parent=5 // pred_fallthru
        _
      %p216 = scmp.le.s32.totalorder 1, %s21
      %p217 = scmp.lt.s32.totalorder %s21, 5
      %p218 = pnand %p216, %p217
      %p219 = pneg %p218
      // Predicated region
      $region25: #{tpu_custom_call.1} parent=5 // pred_check
        _
      $region26: #{tpu_custom_call.1} parent=5 // pred_check_branch
        %221 = sbr.rel (%p218) target = $region28
      $region27: #{tpu_custom_call.1} parent=5 // pred_region
        %s222 = ssub.s32 %s21, 1
        // Predicated region
        $region29: #{tpu_custom_call.1} parent=27 // pred_check
          %p223 = pneg %p54
        $region30: #{tpu_custom_call.1} parent=27 // pred_check_branch
          %225 = sbr.rel (%p223) target = $region32
        $region31: #{tpu_custom_call.1} parent=27 // pred_region
          %226 = dma.done [#allocation3], 128
        $region32: #{tpu_custom_call.1} parent=27 // pred_fallthru
          _
        %s227 = sand.u32 %s71, 1
        %s228 = scalar_lea.sflag [#allocation6], %s227
        %s229 = sand.u32 %s71, 1
        %s230 = smul.addr %s229, 16
        %s231 = scalar_lea.vmem [#allocation5], %s230
        // Predicated region
        $region33: #{tpu_custom_call.1} parent=27 // pred_check
          %p232 = pneg %p84
        $region34: #{tpu_custom_call.1} parent=27 // pred_check_branch
          %234 = sbr.rel (%p232) target = $region36
        $region35: #{tpu_custom_call.1} parent=27 // pred_region
          %235 = dma.done %s228, 256
        $region36: #{tpu_custom_call.1} parent=27 // pred_fallthru
          _
        %p236 = pneg %p54
        %p237 = pneg %p51
        %s238 = sand.u32 %s71, 1
        %s239 = scalar_lea.sflag [#allocation6], %s238
        %s240 = sand.u32 %s71, 1
        %s241 = smul.addr %s240, 16
        %s242 = scalar_lea.vmem [#allocation5], %s241
        %p243 = pneg %p84
        %p244 = pneg %p81
        %p245 = pneg %p110
        %p246 = pneg %p107
        %s247 = sand.u32 %s97, 1
        %s248 = scalar_lea.sflag [#allocation4], %s247
        %s249 = sand.u32 %s97, 1
        %s250 = smul.addr %s249, 16
        %s251 = scalar_lea.vmem [#allocation7], %s250
        %p252 = pneg %p136
        %p253 = pneg %p133
        %s254 = sand.u32 %s26, 1
        %s255 = scalar_lea.sflag [#allocation9], %s254
        %s256 = sand.u32 %s123, 1
        %s257 = smul.addr %s256, 16
        %s258 = scalar_lea.vmem [#allocation8], %s257
        %p259 = pneg %p162
        %p260 = pneg %p159
        %s261 = sand.u32 %s26, 1
        %s262 = scalar_lea.sflag [#allocation9], %s261
        %s263 = sand.u32 %s149, 1
        %s264 = smul.addr %s263, 16
        %s265 = scalar_lea.vmem [#allocation10], %s264
        %s266 = smul.u32 %s30, 2
        %s267 = sadd.s32 %s266, %s31
        %p269 = scmp.eq.s32.totalorder %s31, 0
        // Predicated region
        $region37: #{tpu_custom_call.1} parent=27 // pred_check
          %p270 = pneg %p269
        $region38: #{tpu_custom_call.1} parent=27 // pred_check_branch
          %272 = sbr.rel (%p270) target = $region40
        $region39: #{tpu_custom_call.1} parent=27 // pred_region
          %273 = vst [vmem:[%s251] sm:$0xff] -1e+30
          %274 = vst [vmem:[%s251 + $0x8] sm:$0xff] -1e+30
          %275 = vst [vmem:[%s258] sm:$0xff] 0.0
          %276 = vst [vmem:[%s258 + $0x8] sm:$0xff] 0.0
          %277 = vst [vmem:[%s265] sm:$0xff] -1e+30
          %278 = vst [vmem:[%s265 + $0x8] sm:$0xff] -1e+30
        $region40: #{tpu_custom_call.1} parent=27 // pred_fallthru
          _
        %v279 = vld [vmem:[#allocation2] sm:$0xf]
        %v280 = vld [vmem:[#allocation2 + $0x4] sm:$0xf]
        %v281 = vld [vmem:[%s231] sm:$0xf]
        %v282 = vld [vmem:[%s231 + $0x4] sm:$0xf]
        %v283 = vld [vmem:[%s231 + $0x8] sm:$0xf]
        %v284 = vld [vmem:[%s231 + $0xc] sm:$0xf]
        %v287 = vunpack.c.l.b16 %v279
        %v288 = vunpack.c.l.b16 %v280
        %v289 = vpack.c.b16 %v288, %v287
        %v294 = vunpack.c.l.b16 %v281
        %v295 = vunpack.c.l.b16 %v282
        %v296 = vunpack.c.l.b16 %v283
        %v297 = vunpack.c.l.b16 %v284
        %v298 = vpack.c.b16 %v295, %v294
        %v299 = vpack.c.b16 %v297, %v296
        %vm302 = vcmask 261120
        %v304 = vsel %vm302, %v289, 0
        %306 = vmatprep.subr.bf16.mxu0 0
        %307 = vmatpush1.bf16.msra.mxu0 0
        %308 = vmatprep.subr.bf16.mxu0 0
        %309 = vmatpush1.bf16.msra.mxu0 0
        %310 = vmatprep.subr.bf16.mxu0 0
        %311 = vmatpush1.bf16.msra.mxu0 0
        %312 = vmatprep.subr.bf16.mxu0 0
        %313 = vmatpush1.bf16.msra.mxu0 0
        %314 = vmatprep.subr.bf16.mxu0 0
        %315 = vmatpush1.bf16.msra.mxu0 0
        %316 = vmatprep.subr.bf16.mxu0 0
        %317 = vmatpush1.bf16.msra.mxu0 0
        %318 = vmatprep.subr.bf16.mxu0 0
        %319 = vmatpush1.bf16.msra.mxu0 %v299
        %320 = vmatprep.subr.bf16.mxu0 0
        %321 = vmatpush1.bf16.msra.mxu0 %v298
        %322 = vmatprep.subr.bf16.mxu0 0
        %323 = vmatpush2.bf16.msra.mxu0 0
        %324 = vmatprep.subr.bf16.mxu0 0
        %325 = vmatpush2.bf16.msra.mxu0 0
        %326 = vmatprep.subr.bf16.mxu0 0
        %327 = vmatpush2.bf16.msra.mxu0 0
        %328 = vmatprep.subr.bf16.mxu0 0
        %329 = vmatpush2.bf16.msra.mxu0 0
        %330 = vmatprep.subr.bf16.mxu0 0
        %331 = vmatpush2.bf16.msra.mxu0 0
        %332 = vmatprep.subr.bf16.mxu0 0
        %333 = vmatpush2.bf16.msra.mxu0 0
        %334 = vmatprep.subr.bf16.mxu0 0
        %335 = vmatpush2.bf16.msra.mxu0 0
        %336 = vmatprep.subr.bf16.mxu0 0
        %337 = vmatpush2.bf16.msra.mxu0 0
        %338 = vmatprep.mubr.bf16.mxu0 0
        %339 = vmatmul.mubr.bf16.gmra.mxu0 %v304
        %v340 = vpop.f32.mrf.mxu0
        %v341 = vadd.f32 0.0, %v340
        %v342 = vpop.f32.mrf.mxu0
        %v343 = vpop.f32.mrf.mxu0
        %v344 = vadd.f32 0.0, %v343
        %v345 = vpop.f32.mrf.mxu0
        %346 = vdwg.mxu0
        %s347 = smul.u32 %s30, 2
        %s348 = sadd.s32 %s347, %s31
        %s349 = smul.u32 %s348, 128
        %v350 = vlaneseq
        %v351 = vand.u32 %v350, 127
        %v352 = vstv %s349
        %v353 = vadd.s32 %v352, %v351
        %vm354 = vcmp.lt.s32.totalorder %v353, 448
        %v355 = vsel %vm354, %v341, -1e+30
        %v356 = vsel %vm354, %v344, -1e+30
        %v357 = vld [vmem:[%s251] sm:$0xff]
        %v358 = vld [vmem:[%s251 + $0x8] sm:$0xff]
        %359 = vmax.xlane.f32.xlu0 %v355
        %v360 = vpop.xlane.xlu0 %359
        %361 = vmax.xlane.f32.xlu0 %v356
        %v362 = vpop.xlane.xlu0 %361
        %v363 = vmax.f32 %v357, %v360
        %v364 = vmax.f32 %v358, %v362
        %366 = vset.pattern.permute.xlu0 0
        %367 = vperm.xlu0 %366, %v363
        %v368 = vpop.permute.xlu0 %367
        %371 = vset.pattern.permute.xlu0 0
        %372 = vperm.xlu0 %371, %v364
        %v373 = vpop.permute.xlu0 %372
        %v375 = vsub.f32 %v355, %v368
        %v376 = vsub.f32 %v356, %v373
        %v377 = vmul.f32 %v375, 1.442695
        %v378 = vpow.pop %v377
        %v379 = vmul.f32 %v376, 1.442695
        %v380 = vpow.pop %v379
        %v381 = vld [vmem:[%s258] sm:$0xff]
        %v382 = vld [vmem:[%s258 + $0x8] sm:$0xff]
        %v383 = vsub.f32 %v357, %v363
        %v384 = vsub.f32 %v358, %v364
        %v385 = vmul.f32 %v383, 1.442695
        %v386 = vpow.pop %v385
        %v387 = vmul.f32 %v384, 1.442695
        %v388 = vpow.pop %v387
        %v389 = vmul.f32 %v381, %v386
        %v390 = vmul.f32 %v382, %v388
        %v391 = vadd.f32 %v389, %v378
        %v392 = vadd.f32 %v390, %v380
        %393 = vst [vmem:[%s258] sm:$0xff] %v391
        %394 = vst [vmem:[%s258 + $0x8] sm:$0xff] %v392
        %395 = vst [vmem:[%s251] sm:$0xff] %v363
        %396 = vst [vmem:[%s251 + $0x8] sm:$0xff] %v364
        %v397 = vld [vmem:[%s265] sm:$0xff]
        %v398 = vld [vmem:[%s265 + $0x8] sm:$0xff]
        %399 = vmax.xlane.f32.xlu0 %v397
        %v400 = vpop.xlane.xlu0 %399
        %401 = vmax.xlane.f32.xlu0 %v398
        %v402 = vpop.xlane.xlu0 %401
        %v403 = vmax.f32 %v400, %v360
        %v404 = vmax.f32 %v402, %v362
        %vm405 = vcmp.eq.s32.totalorder %v351, 0
        %v406 = vsel %vm405, %v403, -1e+30
        %v407 = vsel %vm405, %v404, -1e+30
        %vm408 = vcmp.ge.f32.partialorder %v397, %v403
        %vm409 = vcmp.ge.f32.partialorder %v398, %v404
        %v410 = vsel %vm408, -1e+30, %v397
        %v411 = vsel %vm409, -1e+30, %v398
        %vm412 = vcmp.ge.f32.partialorder %v355, %v403
        %vm413 = vcmp.ge.f32.partialorder %v356, %v404
        %v414 = vsel %vm412, -1e+30, %v355
        %v415 = vsel %vm413, -1e+30, %v356
        %416 = vmax.xlane.f32.xlu0 %v410
        %v417 = vpop.xlane.xlu0 %416
        %418 = vmax.xlane.f32.xlu0 %v411
        %v419 = vpop.xlane.xlu0 %418
        %420 = vmax.xlane.f32.xlu0 %v414
        %v421 = vpop.xlane.xlu0 %420
        %422 = vmax.xlane.f32.xlu0 %v415
        %v423 = vpop.xlane.xlu0 %422
        %v424 = vmax.f32 %v417, %v421
        %v425 = vmax.f32 %v419, %v423
        %vm426 = vcmp.eq.s32.totalorder %v351, 1
        %v427 = vsel %vm426, %v424, %v406
        %v428 = vsel %vm426, %v425, %v407
        %vm429 = vcmp.ge.f32.partialorder %v410, %v424
        %vm430 = vcmp.ge.f32.partialorder %v411, %v425
        %v431 = vsel %vm429, -1e+30, %v410
        %v432 = vsel %vm430, -1e+30, %v411
        %vm433 = vcmp.ge.f32.partialorder %v414, %v424
        %vm434 = vcmp.ge.f32.partialorder %v415, %v425
        %v435 = vsel %vm433, -1e+30, %v414
        %v436 = vsel %vm434, -1e+30, %v415
        %437 = vmax.xlane.f32.xlu0 %v431
        %v438 = vpop.xlane.xlu0 %437
        %439 = vmax.xlane.f32.xlu0 %v432
        %v440 = vpop.xlane.xlu0 %439
        %441 = vmax.xlane.f32.xlu0 %v435
        %v442 = vpop.xlane.xlu0 %441
        %443 = vmax.xlane.f32.xlu0 %v436
        %v444 = vpop.xlane.xlu0 %443
        %v445 = vmax.f32 %v438, %v442
        %v446 = vmax.f32 %v440, %v444
        %vm447 = vcmp.eq.s32.totalorder %v351, 2
        %v448 = vsel %vm447, %v445, %v427
        %v449 = vsel %vm447, %v446, %v428
        %vm450 = vcmp.ge.f32.partialorder %v431, %v445
        %vm451 = vcmp.ge.f32.partialorder %v432, %v446
        %v452 = vsel %vm450, -1e+30, %v431
        %v453 = vsel %vm451, -1e+30, %v432
        %vm454 = vcmp.ge.f32.partialorder %v435, %v445
        %vm455 = vcmp.ge.f32.partialorder %v436, %v446
        %v456 = vsel %vm454, -1e+30, %v435
        %v457 = vsel %vm455, -1e+30, %v436
        %458 = vmax.xlane.f32.xlu0 %v452
        %v459 = vpop.xlane.xlu0 %458
        %460 = vmax.xlane.f32.xlu0 %v453
        %v461 = vpop.xlane.xlu0 %460
        %462 = vmax.xlane.f32.xlu0 %v456
        %v463 = vpop.xlane.xlu0 %462
        %464 = vmax.xlane.f32.xlu0 %v457
        %v465 = vpop.xlane.xlu0 %464
        %v466 = vmax.f32 %v459, %v463
        %v467 = vmax.f32 %v461, %v465
        %vm468 = vcmp.eq.s32.totalorder %v351, 3
        %v469 = vsel %vm468, %v466, %v448
        %v470 = vsel %vm468, %v467, %v449
        %vm471 = vcmp.ge.f32.partialorder %v452, %v466
        %vm472 = vcmp.ge.f32.partialorder %v453, %v467
        %v473 = vsel %vm471, -1e+30, %v452
        %v474 = vsel %vm472, -1e+30, %v453
        %vm475 = vcmp.ge.f32.partialorder %v456, %v466
        %vm476 = vcmp.ge.f32.partialorder %v457, %v467
        %v477 = vsel %vm475, -1e+30, %v456
        %v478 = vsel %vm476, -1e+30, %v457
        %479 = vmax.xlane.f32.xlu0 %v473
        %v480 = vpop.xlane.xlu0 %479
        %481 = vmax.xlane.f32.xlu0 %v474
        %v482 = vpop.xlane.xlu0 %481
        %483 = vmax.xlane.f32.xlu0 %v477
        %v484 = vpop.xlane.xlu0 %483
        %485 = vmax.xlane.f32.xlu0 %v478
        %v486 = vpop.xlane.xlu0 %485
        %v487 = vmax.f32 %v480, %v484
        %v488 = vmax.f32 %v482, %v486
        %vm489 = vcmp.eq.s32.totalorder %v351, 4
        %v490 = vsel %vm489, %v487, %v469
        %v491 = vsel %vm489, %v488, %v470
        %492 = vst [vmem:[%s265] sm:$0xff] %v490
        %493 = vst [vmem:[%s265 + $0x8] sm:$0xff] %v491
        %s494 = sand.u32 %s97, 1
        %s495 = scalar_lea.sflag [#allocation4], %s494
        %s496 = sand.u32 %s97, 1
        %s497 = smul.addr %s496, 16
        %s498 = scalar_lea.vmem [#allocation7], %s497
        %s499 = sand.u32 %s26, 1
        %s500 = scalar_lea.sflag [#allocation9], %s499
        %s501 = sand.u32 %s123, 1
        %s502 = smul.addr %s501, 16
        %s503 = scalar_lea.vmem [#allocation8], %s502
        %s504 = sand.u32 %s26, 1
        %s505 = scalar_lea.sflag [#allocation9], %s504
        %s506 = sand.u32 %s149, 1
        %s507 = smul.addr %s506, 16
        %s508 = scalar_lea.vmem [#allocation10], %s507
        // Predicated region
        $region41: #{tpu_custom_call.1} parent=27 // pred_check
          %p509 = pneg %p107
        $region42: #{tpu_custom_call.1} parent=27 // pred_check_branch
          %511 = sbr.rel (%p509) target = $region44
        $region43: #{tpu_custom_call.1} parent=27 // pred_region
          %s513 = ssub.s32 256, 256
          %514 = vsyncadd %s495, %s513
          %s515 = smul.addr %s30, 2
          %s516 = smul.addr %s515, 128
          %s517 = scalar_lea.hbm %s2, %s516
          %s518 = sshll.u32 %s498, 4
          %s519 = int_to_ptr.vmem [resolvable:$true] %s518
          %524 = dma.vmem_to_hbm [thread:$0]  %s519, 256, %s517, %s495, 128, 128, 8
        $region44: #{tpu_custom_call.1} parent=27 // pred_fallthru
          _
        // Predicated region
        $region45: #{tpu_custom_call.1} parent=27 // pred_check
          %p525 = pneg %p133
        $region46: #{tpu_custom_call.1} parent=27 // pred_check_branch
          %527 = sbr.rel (%p525) target = $region48
        $region47: #{tpu_custom_call.1} parent=27 // pred_region
          %s529 = ssub.s32 256, 256
          %530 = vsyncadd %s500, %s529
          %s531 = smul.addr %s30, 2
          %s532 = smul.addr %s531, 128
          %s533 = scalar_lea.hbm %s3, %s532
          %s534 = sshll.u32 %s503, 4
          %s535 = int_to_ptr.vmem [resolvable:$true] %s534
          %540 = dma.vmem_to_hbm [thread:$0]  %s535, 256, %s533, %s500, 128, 128, 8
        $region48: #{tpu_custom_call.1} parent=27 // pred_fallthru
          _
        // Predicated region
        $region49: #{tpu_custom_call.1} parent=27 // pred_check
          %p541 = pneg %p159
        $region50: #{tpu_custom_call.1} parent=27 // pred_check_branch
          %543 = sbr.rel (%p541) target = $region52
        $region51: #{tpu_custom_call.1} parent=27 // pred_region
          %s545 = ssub.s32 256, 256
          %546 = vsyncadd %s505, %s545
          %s547 = smul.addr %s30, 2
          %s548 = smul.addr %s547, 128
          %s549 = scalar_lea.hbm %s4, %s548
          %s550 = sshll.u32 %s508, 4
          %s551 = int_to_ptr.vmem [resolvable:$true] %s550
          %556 = dma.vmem_to_hbm [thread:$0]  %s551, 256, %s549, %s505, 128, 128, 8
        $region52: #{tpu_custom_call.1} parent=27 // pred_fallthru
          _
      $region28: #{tpu_custom_call.1} parent=5 // pred_fallthru
        _
      %p557 = scmp.le.s32.totalorder 2, %s21
      // Predicated region
      $region53: #{tpu_custom_call.1} parent=5 // pred_check
        %p558 = pneg %p557
      $region54: #{tpu_custom_call.1} parent=5 // pred_check_branch
        %560 = sbr.rel (%p558) target = $region56
      $region55: #{tpu_custom_call.1} parent=5 // pred_region
        %s561 = ssub.s32 %s21, 2
        // Predicated region
        $region57: #{tpu_custom_call.1} parent=55 // pred_check
          %p562 = pneg %p113
        $region58: #{tpu_custom_call.1} parent=55 // pred_check_branch
          %564 = sbr.rel (%p562) target = $region60
        $region59: #{tpu_custom_call.1} parent=55 // pred_region
          %s565 = sand.u32 %s98, 1
          %s566 = scalar_lea.sflag [#allocation4], %s565
          %s567 = sand.u32 %s98, 1
          %s568 = smul.addr %s567, 16
          %s569 = scalar_lea.vmem [#allocation7], %s568
          %570 = dma.done %s566, 256
        $region60: #{tpu_custom_call.1} parent=55 // pred_fallthru
          _
        // Predicated region
        $region61: #{tpu_custom_call.1} parent=55 // pred_check
          %p571 = pneg %p139
        $region62: #{tpu_custom_call.1} parent=55 // pred_check_branch
          %573 = sbr.rel (%p571) target = $region64
        $region63: #{tpu_custom_call.1} parent=55 // pred_region
          %s574 = sand.u32 %s27, 1
          %s575 = scalar_lea.sflag [#allocation9], %s574
          %s576 = sand.u32 %s124, 1
          %s577 = smul.addr %s576, 16
          %s578 = scalar_lea.vmem [#allocation8], %s577
          %579 = dma.done %s575, 256
        $region64: #{tpu_custom_call.1} parent=55 // pred_fallthru
          _
        // Predicated region
        $region65: #{tpu_custom_call.1} parent=55 // pred_check
          %p580 = pneg %p165
        $region66: #{tpu_custom_call.1} parent=55 // pred_check_branch
          %582 = sbr.rel (%p580) target = $region68
        $region67: #{tpu_custom_call.1} parent=55 // pred_region
          %s583 = sand.u32 %s27, 1
          %s584 = scalar_lea.sflag [#allocation9], %s583
          %s585 = sand.u32 %s150, 1
          %s586 = smul.addr %s585, 16
          %s587 = scalar_lea.vmem [#allocation10], %s586
          %588 = dma.done %s584, 256
        $region68: #{tpu_custom_call.1} parent=55 // pred_fallthru
          _
      $region56: #{tpu_custom_call.1} parent=5 // pred_fallthru
        _
    $region6: #{tpu_custom_call.1} parent=1 // loop_footer
      %s25 = sadd.s32 1, %s21
    $region7: #{tpu_custom_call.1} parent=1 // loop_footer_branch
      %20 = sbr.rel target = $region3
    $region8: #{tpu_custom_call.1} parent=1 // loop_exit
      _
    %589 = vsyncpa [#allocation3], 1
    %s590 = scalar_lea.sflag [#allocation3], 1
    %591 = vsyncpa %s590, 1
    %592 = vsyncpa [#allocation6], 1
    %s593 = scalar_lea.sflag [#allocation6], 1
    %594 = vsyncpa %s593, 1
    %595 = vsyncpa [#allocation4], 1
    %s596 = scalar_lea.sflag [#allocation4], 1
    %597 = vsyncpa %s596, 1
    %598 = vsyncpa [#allocation9], 1
    %s599 = scalar_lea.sflag [#allocation9], 1
    %600 = vsyncpa %s599, 1

</llo_original>
